<compile_context>
chip_gen: v7x
topology: tpu7x:2x2x1
jax: 0.10.0
libtpu: 0.0.40
codegen_flags: <defaults>
</compile_context>

<pallas_src>
import functools

import jax
import jax.numpy as jnp
import numpy as np
from jax.experimental import pallas as pl
from jax.experimental.pallas import tpu as pltpu


def _round_up(x, m):
    return ((x + m - 1) // m) * m


def _round_down(x, m):
    return (x // m) * m


def _tpu_info():
    try:
        return pltpu.get_tpu_info()
    except Exception:
        return None


def _device_kind():
    try:
        return jax.devices()[0].device_kind.lower()
    except Exception:
        return ""


@functools.lru_cache(maxsize=1)
def _vmem_capacity_bytes():
    info = _tpu_info()
    cap = getattr(info, "vmem_capacity_bytes", None) if info is not None else None
    if cap:
        return int(cap)
    kind = _device_kind()
    if ("v5" in kind) or ("v6" in kind):
        return 128 * 1024 * 1024
    # Conservative default (v7x has 64 MiB / TC).
    return 64 * 1024 * 1024


@functools.lru_cache(maxsize=1)
def _num_tensorcores():
    info = _tpu_info()
    if info is not None:
        for name in ("num_cores", "num_tensorcores", "tensorcores_per_chip",
                     "cores_per_chip", "core_count"):
            v = getattr(info, name, None)
            if isinstance(v, int) and v > 0:
                return v
    return 2 if "v7" in _device_kind() else 1


def _sanitize_tile(t, full, mult):
    """Clamp a user tile to something Mosaic accepts: full extent or multiple of `mult`."""
    if t is None:
        return None
    t = int(t)
    if t >= full:
        return full
    t = _round_down(t, mult)
    if t < mult:
        t = min(mult, full)
    return t


def _auto_tiles(B, in_ft, out_ft, itemsize, out_itemsize, has_bias,
                vmem_budget, num_cores):
    """Pick (tm, tn, tk, has_k) for the (i, j[, k]) grid."""
    # M tile: cover the batch with as few i-blocks as possible -- the weight
    # is re-streamed from HBM once per i-block (dominant traffic term).
    if B <= 512:
        tm = B
    else:
        tm = _round_up(pl.cdiv(B, pl.cdiv(B, 512)), 8)

    # N tile: lane-dense output stores; 512 is a multiple of the 256-wide
    # v6e/v7x MXU.
    tn = out_ft if out_ft <= 512 else 512

    # Megacore: only split a parallel axis when the chip has >= 2 TensorCores,
    # preferring the batch (M) axis so N tiles stay MXU-filling.
    gi, gj = pl.cdiv(B, tm), pl.cdiv(out_ft, tn)
    if num_cores >= 2 and gi * gj < num_cores:
        if B > 8:
            tm = max(8, _round_up(pl.cdiv(B, num_cores), 8))
        elif out_ft > 256:
            tn = max(256, _round_up(pl.cdiv(out_ft, num_cores), 256))
        elif out_ft > 128:
            tn = max(128, _round_up(pl.cdiv(out_ft, num_cores), 128))

    def vmem_bytes(tk, has_k):
        b = 2 * (tm * tk + tk * tn) * itemsize + 2 * tm * tn * out_itemsize
        if has_bias:
            b += 2 * tn * 4
        if has_k:
            b += tm * tn * 4          # worst case: separate f32 accumulator
        return b

    # Take the whole reduction in one shot if it fits the budget.
    if vmem_bytes(in_ft, has_k=False) <= vmem_budget:
        return tm, tn, in_ft, False

    # Otherwise: largest 128-multiple tk that fits, preferring a divisor of
    # in_ft (avoids padding traffic in the wrapper).
    avail = vmem_budget - vmem_bytes(0, has_k=True)
    tk_max = max(128, _round_down(avail // (2 * (tm + tn) * itemsize), 128))
    tk_max = min(tk_max, max(128, _round_down(in_ft, 128)))
    tk = tk_max
    for cand in range(tk_max, 127, -128):
        if in_ft % cand == 0:
            tk = cand
            break
    return tm, tn, tk, True


def _fc_kernel(*refs, has_bias, has_k, acc_in_out):
    """One (tm, tn) output tile; optional reduction over the K grid axis."""
    if has_bias:
        x_ref, w_ref, b_ref = refs[0], refs[1], refs[2]
        rest = refs[3:]
    else:
        x_ref, w_ref, b_ref = refs[0], refs[1], None
        rest = refs[2:]
    o_ref = rest[0]

    # Canonical [tm, tk] x [tk, tn] MXU matmul (weight pre-transposed in the
    # wrapper -> no per-tile XLU transpose), f32 accumulation.
    part = jnp.dot(x_ref[...], w_ref[...], preferred_element_type=jnp.float32)

    if not has_k:
        if has_bias:
            part = part + b_ref[...]
        o_ref[...] = part.astype(o_ref.dtype)          # act == nn.Identity()
        return

    k = pl.program_id(2)
    k_last = pl.num_programs(2) - 1

    if acc_in_out:
        # f32 output: accumulate directly into the resident output block
        # (saves the tm*tn*4 scratch and the finalize copy).
        @pl.when(k == 0)
        def _():
            o_ref[...] = jnp.zeros_like(o_ref)

        o_ref[...] += part

        if has_bias:
            @pl.when(k == k_last)
            def _():
                o_ref[...] += b_ref[...]
    else:
        acc_ref = rest[1]

        @pl.when(k == 0)
        def _():
            acc_ref[...] = jnp.zeros_like(acc_ref)

        acc_ref[...] += part

        @pl.when(k == k_last)
        def _():
            out = acc_ref[...]
            if has_bias:
                out = out + b_ref[...]
            o_ref[...] = out.astype(o_ref.dtype)


def fully_connected(emb, weight, bias=None, *, drop_prob=0.0, training=False,
                    tm=None, tn=None, tk=None, compute_dtype=jnp.bfloat16,
                    xla_fallback_flops=None):
    """Pallas equivalent of FullyConnectedLayer.forward (act = Identity).

    emb:    [B, in_ft]
    weight: [out_ft, in_ft]   (PyTorch nn.Linear convention)
    bias:   [out_ft] or None
    compute_dtype: dtype fed to the MXU (default bfloat16; accumulation is
                   always f32, output keeps emb's original dtype).  Pass None
                   to keep the inputs' dtype.
    xla_fallback_flops: if set, layers with fewer flops use a plain XLA matmul
                        (pallas_call fixed overhead dominates tiny shapes).
    """
    # F.dropout is the identity for drop_prob == 0.0 (module default) / eval.
    # TODO(synk): in-kernel dropout for drop_prob > 0 in training mode not implemented.
    del drop_prob, training

    B, in_ft = emb.shape
    out_ft, in_ft_w = weight.shape
    assert in_ft_w == in_ft, "weight must be [out_ft, in_ft]"
    out_dtype = emb.dtype
    has_bias = bias is not None

    if compute_dtype is not None:
        emb = emb.astype(compute_dtype)
        weight = weight.astype(compute_dtype)
    # TODO(synk): optional fp8 weight path for v7x inference not implemented.

    if xla_fallback_flops is not None and 2 * B * in_ft * out_ft < xla_fallback_flops:
        out = jnp.dot(emb, weight.T, preferred_element_type=jnp.float32)
        if has_bias:
            out = out + bias.astype(jnp.float32)
        return out.astype(out_dtype)

    itemsize = jnp.dtype(emb.dtype).itemsize
    out_itemsize = jnp.dtype(out_dtype).itemsize

    phys_vmem = _vmem_capacity_bytes()
    vmem_budget = (phys_vmem * 3) // 4     # ~96 MiB on v5e/v6e, ~48 MiB on v7x
    num_cores = _num_tensorcores()

    a_tm, a_tn, a_tk, _ = _auto_tiles(B, in_ft, out_ft, itemsize, out_itemsize,
                                      has_bias, vmem_budget, num_cores)
    tm = a_tm if tm is None else _sanitize_tile(tm, B, 8)
    tn = a_tn if tn is None else _sanitize_tile(tn, out_ft, 128)
    tk = a_tk if tk is None else _sanitize_tile(tk, in_ft, 128)
    has_k = tk < in_ft
    acc_in_out = has_k and out_dtype == jnp.float32

    # Pre-transpose the weight once: kernel contracts [tm,tk] x [tk,tn].
    w_t = weight.T                                     # [in_ft, out_ft]

    # Zero-pad the contraction dim so every K block is full (no masked tail,
    # no stale-VMEM hazard). Zero columns contribute exactly zero to the dot.
    if has_k and in_ft % tk != 0:
        k_pad = _round_up(in_ft, tk)
        emb = jnp.pad(emb, ((0, 0), (0, k_pad - in_ft)))
        w_t = jnp.pad(w_t, ((0, k_pad - in_ft), (0, 0)))
    k_total = emb.shape[1]

    gi, gj = pl.cdiv(B, tm), pl.cdiv(out_ft, tn)
    if has_k:
        grid = (gi, gj, k_total // tk)
        dims = ("parallel", "parallel", "arbitrary")
        x_spec = pl.BlockSpec((tm, tk), lambda i, j, k: (i, k))
        w_spec = pl.BlockSpec((tk, tn), lambda i, j, k: (k, j))
        b_spec = pl.BlockSpec((1, tn), lambda i, j, k: (0, j))
        o_spec = pl.BlockSpec((tm, tn), lambda i, j, k: (i, j))
        scratch = [] if acc_in_out else [pltpu.VMEM((tm, tn), jnp.float32)]
    else:
        grid = (gi, gj)
        dims = ("parallel", "parallel")
        x_spec = pl.BlockSpec((tm, tk), lambda i, j: (i, 0))
        w_spec = pl.BlockSpec((tk, tn), lambda i, j: (0, j))
        b_spec = pl.BlockSpec((1, tn), lambda i, j: (0, j))
        o_spec = pl.BlockSpec((tm, tn), lambda i, j: (i, j))
        scratch = []

    inputs = [emb, w_t]
    in_specs = [x_spec, w_spec]
    if has_bias:
        inputs.append(bias.reshape(1, out_ft).astype(jnp.float32))
        in_specs.append(b_spec)

    # Explicit VMEM limit: double-buffered tiles (+ accumulator), clamped to
    # the chip's physical VMEM minus headroom (never above 64 MiB on v7x).
    est = 2 * (tm * tk + tk * tn) * itemsize + 2 * tm * tn * out_itemsize
    if has_bias:
        est += 2 * tn * 4
    if has_k and not acc_in_out:
        est += tm * tn * 4
    vmem_limit = int(min(max(est + (4 << 20), 32 << 20), phys_vmem - (4 << 20)))

    # Re-streaming-aware traffic: activations streamed once per j-block,
    # weight once per i-block, output written once.
    cost = pl.CostEstimate(
        flops=2 * B * in_ft * out_ft,
        transcendentals=0,
        bytes_accessed=itemsize * (B * k_total * gj + k_total * out_ft * gi)
        + out_itemsize * B * out_ft
        + (4 * out_ft * gi * gj if has_bias else 0),
    )

    kernel = functools.partial(_fc_kernel, has_bias=has_bias, has_k=has_k,
                               acc_in_out=acc_in_out)

    return pl.pallas_call(
        kernel,
        out_shape=jax.ShapeDtypeStruct((B, out_ft), out_dtype),
        grid_spec=pltpu.PrefetchScalarGridSpec(
            num_scalar_prefetch=0,
            grid=grid,
            in_specs=in_specs,
            out_specs=o_spec,
            scratch_shapes=scratch,
        ),
        compiler_params=pltpu.CompilerParams(
            dimension_semantics=dims,
            vmem_limit_bytes=vmem_limit,
        ),
        cost_estimate=cost,
    )(*inputs)


def xavier_uniform(key, out_ft, in_ft, dtype=jnp.float32):
    bound = jnp.sqrt(6.0 / (in_ft + out_ft))
    return jax.random.uniform(key, (out_ft, in_ft), dtype, -bound, bound)


if __name__ == "__main__":
    key = jax.random.PRNGKey(0)
    k_x, k_w, k_x2, k_w2 = jax.random.split(key, 4)

    # --- Test 1: module-default small shape, bias, default bf16 compute ----
    B, in_ft, out_ft = 8, 32, 16
    emb = jax.random.normal(k_x, (B, in_ft), dtype=jnp.float32)
    weight = xavier_uniform(k_w, out_ft, in_ft)       # nn.Linear weight [out, in]
    bias = jnp.zeros((out_ft,), jnp.float32)          # module fills bias with 0.0

    out = fully_connected(emb, weight, bias)          # bf16 MXU, f32 accumulate
    jax.block_until_ready(out)
    ref = np.asarray(emb, np.float32) @ np.asarray(weight, np.float32).T \
        + np.asarray(bias, np.float32)
    assert out.shape == (B, out_ft)
    err1 = float(np.max(np.abs(np.asarray(out, np.float32) - ref)))
    assert err1 < 3e-2, f"test1 max err {err1}"

    # --- Test 2: K-reduction path with padded contraction dim, no bias -----
    B2, in2, out2 = 16, 320, 256                      # in2 % tk != 0 -> padded K
    emb2 = jax.random.normal(k_x2, (B2, in2), dtype=jnp.float32)
    w2 = xavier_uniform(k_w2, out2, in2)
    out2_v = fully_connected(emb2, w2, None, tm=8, tn=128, tk=128)
    jax.block_until_ready(out2_v)
    ref2 = np.asarray(emb2, np.float32) @ np.asarray(w2, np.float32).T
    assert out2_v.shape == (B2, out2)
    assert not np.any(np.isnan(np.asarray(out2_v, np.float32)))
    err2 = float(np.max(np.abs(np.asarray(out2_v, np.float32) - ref2)))
    assert err2 < 5e-2, f"test2 max err {err2}"

    # --- Test 3: f32 fidelity path (compute_dtype=None), K path + bias -----
    bias2 = jnp.zeros((out2,), jnp.float32)
    out3 = fully_connected(emb2, w2, bias2, tm=8, tn=128, tk=128,
                           compute_dtype=None)        # accumulates into o_ref
    jax.block_until_ready(out3)
    err3 = float(np.max(np.abs(np.asarray(out3, np.float32) - ref2)))
    assert err3 < 5e-2, f"test3 max err {err3}"

    print("KERNEL_OK")
</pallas_src>

<mosaic_0001>
module attributes {stable_mosaic.version = 11 : i64} {
  func.func @_fc_kernel(%arg0: i32, %arg1: i32, %arg2: memref<8x32xbf16, #tpu.memory_space<vmem>>, %arg3: memref<32x16xbf16, #tpu.memory_space<vmem>>, %arg4: memref<1x16xf32, #tpu.memory_space<vmem>>, %arg5: memref<8x16xf32, #tpu.memory_space<vmem>>) attributes {dimension_semantics = [#tpu.dimension_semantics<parallel>, #tpu.dimension_semantics<parallel>], iteration_bounds = array<i64: 1, 1>, scalar_prefetch = 0 : i64, scratch_operands = 0 : i64, tpu.core_type = #tpu.core_type<tc>, window_params = [{transform_indices = @transform_0, window_bounds = array<i64: 8, 32>}, {transform_indices = @transform_1, window_bounds = array<i64: 32, 16>}, {transform_indices = @transform_2, window_bounds = array<i64: 1, 16>}, {transform_indices = @transform_3, window_bounds = array<i64: 8, 16>}]} {
    %c0 = arith.constant 0 : index
    %c0_0 = arith.constant 0 : index
    %0 = vector.load %arg2[%c0, %c0_0] : memref<8x32xbf16, #tpu.memory_space<vmem>>, vector<8x32xbf16>
    %c0_1 = arith.constant 0 : index
    %c0_2 = arith.constant 0 : index
    %1 = vector.load %arg3[%c0_1, %c0_2] : memref<32x16xbf16, #tpu.memory_space<vmem>>, vector<32x16xbf16>
    %cst = arith.constant dense<0.000000e+00> : vector<8x16xf32>
    %2 = tpu.matmul %0, %1, %cst {dimension_numbers = #tpu.dot_dimension_numbers<[1], [0], [0], [1], [0, 0, 1, 1], [], []>} : vector<8x32xbf16>, vector<32x16xbf16>, vector<8x16xf32> -> vector<8x16xf32>
    %c0_3 = arith.constant 0 : index
    %c0_4 = arith.constant 0 : index
    %3 = vector.load %arg4[%c0_3, %c0_4] : memref<1x16xf32, #tpu.memory_space<vmem>>, vector<1x16xf32>
    %4 = vector.broadcast %3 : vector<1x16xf32> to vector<8x16xf32>
    %5 = arith.addf %2, %4 : vector<8x16xf32>
    %c0_5 = arith.constant 0 : index
    %c0_6 = arith.constant 0 : index
    %6 = vector.load %arg5[%c0_5, %c0_6] : memref<8x16xf32, #tpu.memory_space<vmem>>, vector<8x16xf32>
    tpu.vector_store %arg5[%c0_5, %c0_6], %5 {strides = array<i32>} : memref<8x16xf32, #tpu.memory_space<vmem>>, vector<8x16xf32>,
    return
  }
  func.func @transform_0(%arg0: i32, %arg1: i32) -> (i32, i32) {
    %c0_i32 = arith.constant 0 : i32
    %c0_i32_0 = arith.constant 0 : i32
    return %arg0, %c0_i32 : i32, i32
  }
  func.func @transform_1(%arg0: i32, %arg1: i32) -> (i32, i32) {
    %c0_i32 = arith.constant 0 : i32
    %c0_i32_0 = arith.constant 0 : i32
    return %c0_i32, %arg1 : i32, i32
  }
  func.func @transform_2(%arg0: i32, %arg1: i32) -> (i32, i32) {
    %c0_i32 = arith.constant 0 : i32
    %c0_i32_0 = arith.constant 0 : i32
    return %c0_i32, %arg1 : i32, i32
  }
  func.func @transform_3(%arg0: i32, %arg1: i32) -> (i32, i32) {
    %c0_i32 = arith.constant 0 : i32
    return %arg0, %arg1 : i32, i32
  }
}

</mosaic_0001>

<llo_original>
// kernel: tpu_custom_call.1
$region0: #{tpu_custom_call.1}
  #allocation0 [shape = 'u32[]', space=smem, size = 0x4, offset = 0x4, fixed_abs, tag = 'smem constant byte address 0x4 - core index']
  #allocation1 [shape = 'u32[144,128]{1,0:T(1,128)}', space=vmem, size = 0x12000, scoped, tag = 'internal scratch']
  %s0 = inlined_call_operand.vmem [shape: bf16[8,32], index: 0, kind: input, shape index: {}]
  %s1 = inlined_call_operand.vmem [shape: bf16[32,16], index: 1, kind: input, shape index: {}]
  %s2 = inlined_call_operand.vmem [shape: f32[1,16], index: 2, kind: input, shape index: {}]
  %s3 = inlined_call_operand.hbm [shape: f32[8,16], index: 3, kind: output, shape index: {}]
  %s4 = sld [smem:[#allocation0]]
  $region22: #{tpu_custom_call.1} parent=0
    _
  %s6 = ssub.s32 1, %s4
  %s7 = scalar_select 0, %s6, %s4
  $region1: #{tpu_custom_call.1} parent=0
    #allocation2 [shape = 'u8[4096]{0}', space=vmem, size = 0x1000, scoped, tag = 'output window, operand 0, single buffered']
    #allocation3 [shape = 's32[1]{0}', space=sflag, size = 0x4, scoped, tag = 'scoped memory for tpu_custom_call.1']
    %8 = vsyncpa [#allocation3], 0
    // Predicated region
    $region2: #{tpu_custom_call.1} parent=1 // pred_check
      _
    $region3: #{tpu_custom_call.1} parent=1 // pred_check_branch
      %10 = sbr.rel (0) target = $region5
    $region4: #{tpu_custom_call.1} parent=1 // pred_region
      _
    $region5: #{tpu_custom_call.1} parent=1 // pred_fallthru
      _
    // Predicated region
    $region6: #{tpu_custom_call.1} parent=1 // pred_check
      _
    $region7: #{tpu_custom_call.1} parent=1 // pred_check_branch
      %12 = sbr.rel (0) target = $region9
    $region8: #{tpu_custom_call.1} parent=1 // pred_region
      _
    $region9: #{tpu_custom_call.1} parent=1 // pred_fallthru
      _
    // Predicated region
    $region10: #{tpu_custom_call.1} parent=1 // pred_check
      _
    $region11: #{tpu_custom_call.1} parent=1 // pred_check_branch
      %14 = sbr.rel (0) target = $region13
    $region12: #{tpu_custom_call.1} parent=1 // pred_region
      _
    $region13: #{tpu_custom_call.1} parent=1 // pred_fallthru
      _
    %v16 = vld [vmem:[%s0] sm:$0xf]
    %v17 = vld [vmem:[%s1] sm:$0xf]
    %v18 = vld [vmem:[%s1 + $0x4] sm:$0xf]
    %v19 = vld [vmem:[%s1 + $0x8] sm:$0xf]
    %v20 = vld [vmem:[%s1 + $0xc] sm:$0xf]
    %v21 = vld [vmem:[%s2] sm:$0x1]
    %v23 = vlaneseq
    %v24 = vshrl.u32 %v23, 7
    %v25 = vsub.s32 0, %v24
    %v26 = vrot.slane %v21, %v25
    %v32 = vunpack.c.l.b16 %v17
    %v33 = vunpack.c.l.b16 %v18
    %v34 = vunpack.c.l.b16 %v19
    %v35 = vunpack.c.l.b16 %v20
    %v36 = vpack.c.b16 %v33, %v32
    %v37 = vpack.c.b16 %v35, %v34
    %vm40 = vcmask 261120
    %v42 = vsel %vm40, %v16, 0
    %44 = vmatprep.subr.bf16.mxu0 0
    %45 = vmatpush1.bf16.msra.mxu0 %v36
    %46 = vmatprep.subr.bf16.mxu0 0
    %47 = vmatpush1.bf16.msra.mxu0 %v37
    %48 = vmatprep.subr.bf16.mxu0 0
    %49 = vmatpush1.bf16.msra.mxu0 0
    %50 = vmatprep.subr.bf16.mxu0 0
    %51 = vmatpush1.bf16.msra.mxu0 0
    %52 = vmatprep.subr.bf16.mxu0 0
    %53 = vmatpush1.bf16.msra.mxu0 0
    %54 = vmatprep.subr.bf16.mxu0 0
    %55 = vmatpush1.bf16.msra.mxu0 0
    %56 = vmatprep.subr.bf16.mxu0 0
    %57 = vmatpush1.bf16.msra.mxu0 0
    %58 = vmatprep.subr.bf16.mxu0 0
    %59 = vmatpush1.bf16.msra.mxu0 0
    %60 = vmatprep.subr.bf16.mxu0 0
    %61 = vmatpush1.bf16.msra.mxu0 0
    %62 = vmatprep.subr.bf16.mxu0 0
    %63 = vmatpush1.bf16.msra.mxu0 0
    %64 = vmatprep.subr.bf16.mxu0 0
    %65 = vmatpush1.bf16.msra.mxu0 0
    %66 = vmatprep.subr.bf16.mxu0 0
    %67 = vmatpush1.bf16.msra.mxu0 0
    %68 = vmatprep.subr.bf16.mxu0 0
    %69 = vmatpush1.bf16.msra.mxu0 0
    %70 = vmatprep.subr.bf16.mxu0 0
    %71 = vmatpush1.bf16.msra.mxu0 0
    %72 = vmatprep.subr.bf16.mxu0 0
    %73 = vmatpush1.bf16.msra.mxu0 0
    %74 = vmatprep.subr.bf16.mxu0 0
    %75 = vmatpush1.bf16.msra.mxu0 0
    %76 = vmatprep.mubr.bf16.mxu0 0
    %77 = vmatmul.mubr.bf16.gmra.mrb[0].mxu0 %v42
    %v78 = vpop.f32.mrb[0].mxu0
    %v79 = vadd.f32 %v26, %v78
    %v80 = vpop.f32.mrb[0].mxu0
    %v81 = vpop.f32.mrb[0].mxu0
    %v82 = vpop.f32.mrb[0].mxu0
    %83 = vdwg.mxu0
    %vm84 = vcmask 130048
    %85 = vst.msk [vmem:[#allocation2] sm:$0xff] %vm84, %v79
    // Predicated region
    $region14: #{tpu_custom_call.1} parent=1 // pred_check
      _
    $region15: #{tpu_custom_call.1} parent=1 // pred_check_branch
      %87 = sbr.rel (0) target = $region17
    $region16: #{tpu_custom_call.1} parent=1 // pred_region
      %s89 = ssub.s32 128, 128
      %90 = vsyncadd [#allocation3], %s89
      %s92 = sshll.u32 [#allocation2], 4
      %s93 = int_to_ptr.vmem [resolvable:$true] %s92
      %95 = dma.vmem_to_hbm [thread:$0]  %s93, 128, %s3, [#allocation3]
    $region17: #{tpu_custom_call.1} parent=1 // pred_fallthru
      _
    // Predicated region
    $region18: #{tpu_custom_call.1} parent=1 // pred_check
      _
    $region19: #{tpu_custom_call.1} parent=1 // pred_check_branch
      %97 = sbr.rel (0) target = $region21
    $region20: #{tpu_custom_call.1} parent=1 // pred_region
      %98 = dma.done [#allocation3], 128
    $region21: #{tpu_custom_call.1} parent=1 // pred_fallthru
      _
    %99 = vsyncpa [#allocation3], 1

</llo_original>
